<compile_context>
chip_gen: v6e
topology: v6e:2x2x1
jax: 0.10.0
libtpu: 0.0.40
codegen_flags: <defaults>
</compile_context>

<pallas_src>
import math

import numpy as np
import jax
import jax.numpy as jnp
from jax.experimental import pallas as pl
from jax.experimental.pallas import tpu as pltpu


def _round_up(x, m):
    return ((x + m - 1) // m) * m


# ----------------------------------------------------------------------------
# glue: sinusoidal timestep projection (Timesteps module, parameter-free)
# ----------------------------------------------------------------------------
def make_timestep_freqs(num_channels=256, downscale_freq_shift=1.0,
                        max_period=10000):
    half_dim = num_channels // 2
    exponent = -math.log(max_period) * np.arange(half_dim, dtype=np.float32)
    exponent = exponent / (half_dim - downscale_freq_shift)
    return jnp.asarray(np.exp(exponent), dtype=jnp.float32)          # (half,)


def timestep_proj(timesteps, freqs, flip_sin_to_cos=True, scale=1.0):
    # matches get_timestep_embedding (num_channels even -> no pad branch)
    arg = scale * (timesteps.astype(jnp.float32)[:, None] * freqs[None, :])
    if flip_sin_to_cos:
        return jnp.concatenate([jnp.cos(arg), jnp.sin(arg)], axis=-1)
    return jnp.concatenate([jnp.sin(arg), jnp.cos(arg)], axis=-1)


# ----------------------------------------------------------------------------
# Pallas kernel: linear_1 -> SiLU -> linear_2 + pre-gathered class emb add
# ----------------------------------------------------------------------------
def _cond_embed_kernel(temb_ref, cls_ref, w1_ref, b1_ref, w2_ref, o_ref):
    # temb_ref: (TB, 256)  sinusoidal timestep projection, one row tile
    # cls_ref : (TB, Ep)   pre-gathered class embedding (+ linear_2 bias)
    # w1_ref  : (256, Ep)  linear_1 weight (in, out), zero-padded columns
    # b1_ref  : (1, Ep)    linear_1 bias
    # w2_ref  : (Ep, Ep)   linear_2 weight (its bias folded into cls table)
    # o_ref   : (TB, Ep)
    h = jnp.dot(temb_ref[...], w1_ref[...], preferred_element_type=jnp.float32)
    h = h + b1_ref[...].astype(jnp.float32)
    h = h * jax.nn.sigmoid(h)                               # SiLU (exp on EUP)
    h = jnp.dot(h.astype(w2_ref.dtype), w2_ref[...],
                preferred_element_type=jnp.float32)
    o_ref[...] = (h + cls_ref[...].astype(jnp.float32)).astype(o_ref.dtype)


def _cond_embed_pallas(temb, cls, w1, b1, w2, *, tb):
    Bp, K = temb.shape
    Ep = w1.shape[1]
    assert Bp % tb == 0
    nsteps = Bp // tb
    itemsize = jnp.dtype(temb.dtype).itemsize

    # VMEM budget: single-buffered weights + double-buffered streamed tiles,
    # with 2x headroom, capped well below v7x's 64 MiB physical VMEM.
    weight_bytes = (K * Ep + 8 * Ep + Ep * Ep) * itemsize
    stream_bytes = 2 * (tb * K + 2 * tb * Ep) * itemsize
    vmem_limit = int(min(max(2 * (weight_bytes + stream_bytes), 8 << 20),
                         40 << 20))

    cost = pl.CostEstimate(
        flops=2 * Bp * (K * Ep + Ep * Ep),
        transcendentals=Bp * Ep,
        bytes_accessed=itemsize * (Bp * (K + 2 * Ep) + K * Ep + Ep * Ep + Ep))

    return pl.pallas_call(
        _cond_embed_kernel,
        out_shape=jax.ShapeDtypeStruct((Bp, Ep), temb.dtype),
        grid_spec=pltpu.PrefetchScalarGridSpec(
            num_scalar_prefetch=0,
            grid=(nsteps,),
            in_specs=[
                pl.BlockSpec((tb, K), lambda b: (b, 0)),            # temb
                pl.BlockSpec((tb, Ep), lambda b: (b, 0)),           # cls rows
                # constant-index weights: single-buffered (no re-DMA anyway)
                pl.BlockSpec((K, Ep), lambda b: (0, 0),
                             pipeline_mode=pl.Buffered(1)),         # w1
                pl.BlockSpec((1, Ep), lambda b: (0, 0),
                             pipeline_mode=pl.Buffered(1)),         # b1
                pl.BlockSpec((Ep, Ep), lambda b: (0, 0),
                             pipeline_mode=pl.Buffered(1)),         # w2
            ],
            out_specs=pl.BlockSpec((tb, Ep), lambda b: (b, 0)),
        ),
        compiler_params=pltpu.CompilerParams(
            dimension_semantics=(("parallel",) if nsteps > 1
                                 else ("arbitrary",)),
            vmem_limit_bytes=vmem_limit),
        cost_estimate=cost,
    )(temb, cls, w1, b1, w2)


# ----------------------------------------------------------------------------
# CombinedTimestepLabelEmbeddings (JAX/Pallas version)
# ----------------------------------------------------------------------------
class CombinedTimestepLabelEmbeddingsPallas:
    NUM_CHANNELS = 256          # Timesteps num_channels in the reference module

    def __init__(self, num_classes, embedding_dim, class_dropout_prob=0.0,
                 dtype=jnp.float32, key=None):
        self.num_classes = num_classes
        self.embedding_dim = embedding_dim
        self.dtype = dtype
        self.use_cfg_embedding = class_dropout_prob > 0
        num_rows = num_classes + int(self.use_cfg_embedding)

        key = jax.random.PRNGKey(0) if key is None else key
        k1, k2, k3, k4, k5 = jax.random.split(key, 5)
        in_ch = self.NUM_CHANNELS
        E = embedding_dim
        b1_bound = 1.0 / math.sqrt(in_ch)
        b2_bound = 1.0 / math.sqrt(E)
        # TimestepEmbedding.linear_1 : 256 -> E (stored as (in, out))
        self.w1 = jax.random.uniform(k1, (in_ch, E), jnp.float32,
                                     -b1_bound, b1_bound)
        self.b1 = jax.random.uniform(k2, (E,), jnp.float32, -b1_bound, b1_bound)
        # TimestepEmbedding.linear_2 : E -> E
        self.w2 = jax.random.uniform(k3, (E, E), jnp.float32,
                                     -b2_bound, b2_bound)
        self.b2 = jax.random.uniform(k4, (E,), jnp.float32, -b2_bound, b2_bound)
        # LabelEmbedding table (nn.Embedding default init: N(0, 1))
        self.emb_table = jax.random.normal(k5, (num_rows, E), jnp.float32)

        # frequencies for the sinusoidal timestep projection
        self.freqs = make_timestep_freqs(in_ch, downscale_freq_shift=1.0)

        # ---- kernel-side parameter layout, built once ----
        Ep = _round_up(E, 128)                    # lane-dense hidden dim
        self._Ep = Ep
        self._w1_p = jnp.zeros((in_ch, Ep), dtype).at[:, :E].set(
            self.w1.astype(dtype))
        self._b1_p = jnp.zeros((1, Ep), dtype).at[0, :E].set(
            self.b1.astype(dtype))
        self._w2_p = jnp.zeros((Ep, Ep), dtype).at[:E, :E].set(
            self.w2.astype(dtype))
        # 2-D table (num_rows, Ep); linear_2 bias folded in once at init.
        tab_fused = (self.emb_table + self.b2[None, :]).astype(dtype)
        self._table_p = jnp.zeros((num_rows, Ep), dtype).at[:, :E].set(
            tab_fused)

    def __call__(self, timestep, class_labels, hidden_dtype=jnp.float32,
                 force_drop_ids=None):
        B = timestep.shape[0]
        E = self.embedding_dim
        Ep = self._Ep

        # Timesteps -> (B, 256) sinusoidal projection, cast as the module does
        temb = timestep_proj(timestep, self.freqs)
        temb = temb.astype(hidden_dtype).astype(self.dtype)

        labels = class_labels
        if force_drop_ids is not None:            # LabelEmbedding.token_drop
            # Row `num_classes` only exists when class_dropout_prob > 0
            # (use_cfg_embedding), matching the reference module.
            labels = jnp.where(force_drop_ids == 1, self.num_classes, labels)
        labels = labels.astype(jnp.int32)

        # LabelEmbedding gather in glue (HBM gather); rows already contain b2.
        cls = jnp.take(self._table_p, labels, axis=0)           # (B, Ep)

        # batch tiling: one fat block for small B; 128-row tiles for large B
        if B <= 128:
            TB = Bp = _round_up(max(B, 8), 8)
        else:
            TB = 128
            Bp = _round_up(B, TB)
        temb_p = jnp.zeros((Bp, self.NUM_CHANNELS), self.dtype).at[:B].set(temb)
        cls_p = jnp.zeros((Bp, Ep), self.dtype).at[:B].set(cls)

        out = _cond_embed_pallas(temb_p, cls_p, self._w1_p, self._b1_p,
                                 self._w2_p, tb=TB)
        return out[:B, :E]


# ----------------------------------------------------------------------------
# main
# ----------------------------------------------------------------------------
if __name__ == "__main__":
    B = 2
    EMBED_DIM = 32
    NUM_CLASSES = 16

    key = jax.random.PRNGKey(0)
    k_t, k_l, k_p = jax.random.split(key, 3)
    timestep = jax.random.uniform(k_t, (B,), jnp.float32, 0.0, 1000.0)
    class_labels = jax.random.randint(k_l, (B,), 0, NUM_CLASSES,
                                      dtype=jnp.int32)

    mod = CombinedTimestepLabelEmbeddingsPallas(
        num_classes=NUM_CLASSES, embedding_dim=EMBED_DIM,
        class_dropout_prob=0.0, dtype=jnp.float32, key=k_p)

    out = mod(timestep, class_labels)
    out = jax.block_until_ready(out)

    # quiet correctness check against a float64 numpy reference (shares the
    # same glue-computed sinusoidal projection, isolating the kernel path)
    temb = np.asarray(timestep_proj(timestep, mod.freqs), dtype=np.float64)
    w1 = np.asarray(mod.w1, np.float64)
    b1 = np.asarray(mod.b1, np.float64)
    w2 = np.asarray(mod.w2, np.float64)
    b2 = np.asarray(mod.b2, np.float64)
    tab = np.asarray(mod.emb_table, np.float64)
    h = temb @ w1 + b1
    h = h * (1.0 / (1.0 + np.exp(-h)))            # SiLU
    h = h @ w2 + b2
    ref = h + tab[np.asarray(class_labels)]
    np.testing.assert_allclose(np.asarray(out), ref, rtol=1e-4, atol=1e-4)

    assert out.shape == (B, EMBED_DIM)
    print("KERNEL_OK")
</pallas_src>

<mosaic_0001>
module attributes {stable_mosaic.version = 11 : i64} {
  func.func @_cond_embed_kernel(%arg0: i32, %arg1: memref<8x256xf32, #tpu.memory_space<vmem>>, %arg2: memref<8x128xf32, #tpu.memory_space<vmem>>, %arg3: memref<256x128xf32, #tpu.memory_space<vmem>>, %arg4: memref<1x128xf32, #tpu.memory_space<vmem>>, %arg5: memref<128x128xf32, #tpu.memory_space<vmem>>, %arg6: memref<8x128xf32, #tpu.memory_space<vmem>>) attributes {dimension_semantics = [#tpu.dimension_semantics<arbitrary>], iteration_bounds = array<i64: 1>, scalar_prefetch = 0 : i64, scratch_operands = 0 : i64, tpu.core_type = #tpu.core_type<tc>, window_params = [{transform_indices = @transform_0, window_bounds = array<i64: 8, 256>}, {transform_indices = @transform_1, window_bounds = array<i64: 8, 128>}, {pipeline_mode = #tpu.pipeline_mode<synchronous>, transform_indices = @transform_2, window_bounds = array<i64: 256, 128>}, {pipeline_mode = #tpu.pipeline_mode<synchronous>, transform_indices = @transform_3, window_bounds = array<i64: 1, 128>}, {pipeline_mode = #tpu.pipeline_mode<synchronous>, transform_indices = @transform_4, window_bounds = array<i64: 128, 128>}, {transform_indices = @transform_5, window_bounds = array<i64: 8, 128>}]} {
    %c0 = arith.constant 0 : index
    %c0_0 = arith.constant 0 : index
    %0 = vector.load %arg1[%c0, %c0_0] : memref<8x256xf32, #tpu.memory_space<vmem>>, vector<8x256xf32>
    %c0_1 = arith.constant 0 : index
    %c0_2 = arith.constant 0 : index
    %1 = vector.load %arg3[%c0_1, %c0_2] : memref<256x128xf32, #tpu.memory_space<vmem>>, vector<256x128xf32>
    %cst = arith.constant dense<0.000000e+00> : vector<8x128xf32>
    %2 = tpu.matmul %0, %1, %cst {dimension_numbers = #tpu.dot_dimension_numbers<[1], [0], [0], [1], [0, 0, 1, 1], [], []>} : vector<8x256xf32>, vector<256x128xf32>, vector<8x128xf32> -> vector<8x128xf32>
    %c0_3 = arith.constant 0 : index
    %c0_4 = arith.constant 0 : index
    %3 = vector.load %arg4[%c0_3, %c0_4] : memref<1x128xf32, #tpu.memory_space<vmem>>, vector<1x128xf32>
    %4 = vector.broadcast %3 : vector<1x128xf32> to vector<8x128xf32>
    %5 = arith.addf %2, %4 : vector<8x128xf32>
    %6 = arith.negf %5 : vector<8x128xf32>
    %7 = math.exp %6 : vector<8x128xf32>
    %cst_5 = arith.constant 1.000000e+00 : f32
    %8 = vector.broadcast %cst_5 : f32 to vector<8x128xf32>
    %9 = arith.addf %8, %7 : vector<8x128xf32>
    %10 = arith.divf %8, %9 : vector<8x128xf32>
    %11 = arith.mulf %5, %10 : vector<8x128xf32>
    %c0_6 = arith.constant 0 : index
    %c0_7 = arith.constant 0 : index
    %12 = vector.load %arg5[%c0_6, %c0_7] : memref<128x128xf32, #tpu.memory_space<vmem>>, vector<128x128xf32>
    %cst_8 = arith.constant dense<0.000000e+00> : vector<8x128xf32>
    %13 = tpu.matmul %11, %12, %cst_8 {dimension_numbers = #tpu.dot_dimension_numbers<[1], [0], [0], [1], [0, 0, 1, 1], [], []>} : vector<8x128xf32>, vector<128x128xf32>, vector<8x128xf32> -> vector<8x128xf32>
    %c0_9 = arith.constant 0 : index
    %c0_10 = arith.constant 0 : index
    %14 = vector.load %arg2[%c0_9, %c0_10] : memref<8x128xf32, #tpu.memory_space<vmem>>, vector<8x128xf32>
    %15 = arith.addf %13, %14 : vector<8x128xf32>
    %c0_11 = arith.constant 0 : index
    %c0_12 = arith.constant 0 : index
    %16 = vector.load %arg6[%c0_11, %c0_12] : memref<8x128xf32, #tpu.memory_space<vmem>>, vector<8x128xf32>
    tpu.vector_store %arg6[%c0_11, %c0_12], %15 {strides = array<i32>} : memref<8x128xf32, #tpu.memory_space<vmem>>, vector<8x128xf32>,
    return
  }
  func.func @transform_0(%arg0: i32) -> (i32, i32) {
    %c0_i32 = arith.constant 0 : i32
    %c0_i32_0 = arith.constant 0 : i32
    return %arg0, %c0_i32 : i32, i32
  }
  func.func @transform_1(%arg0: i32) -> (i32, i32) {
    %c0_i32 = arith.constant 0 : i32
    %c0_i32_0 = arith.constant 0 : i32
    return %arg0, %c0_i32 : i32, i32
  }
  func.func @transform_2(%arg0: i32) -> (i32, i32) {
    %c0_i32 = arith.constant 0 : i32
    %c0_i32_0 = arith.constant 0 : i32
    %c0_i32_1 = arith.constant 0 : i32
    return %c0_i32, %c0_i32_0 : i32, i32
  }
  func.func @transform_3(%arg0: i32) -> (i32, i32) {
    %c0_i32 = arith.constant 0 : i32
    %c0_i32_0 = arith.constant 0 : i32
    %c0_i32_1 = arith.constant 0 : i32
    return %c0_i32, %c0_i32_0 : i32, i32
  }
  func.func @transform_4(%arg0: i32) -> (i32, i32) {
    %c0_i32 = arith.constant 0 : i32
    %c0_i32_0 = arith.constant 0 : i32
    %c0_i32_1 = arith.constant 0 : i32
    return %c0_i32, %c0_i32_0 : i32, i32
  }
  func.func @transform_5(%arg0: i32) -> (i32, i32) {
    %c0_i32 = arith.constant 0 : i32
    %c0_i32_0 = arith.constant 0 : i32
    return %arg0, %c0_i32 : i32, i32
  }
}

</mosaic_0001>

<llo_original>
// kernel: tpu_custom_call.1
$region0: #{tpu_custom_call.1}
  #allocation0 [shape = 'u32[]', space=smem, size = 0x4, offset = 0x4, fixed_abs, tag = 'smem constant byte address 0x4 - core index']
  #allocation1 [shape = 'u32[144,128]{1,0:T(1,128)}', space=vmem, size = 0x12000, scoped, tag = 'internal scratch']
  %s0 = inlined_call_operand.hbm [shape: f32[8,256], index: 0, kind: input, shape index: {}]
  %s1 = inlined_call_operand.hbm [shape: f32[8,128], index: 1, kind: input, shape index: {}]
  %s2 = inlined_call_operand.hbm [shape: f32[256,128], index: 2, kind: input, shape index: {}]
  %s3 = inlined_call_operand.vmem [shape: f32[1,128], index: 3, kind: input, shape index: {}]
  %s4 = inlined_call_operand.hbm [shape: f32[128,128], index: 4, kind: input, shape index: {}]
  %s5 = inlined_call_operand.hbm [shape: f32[8,128], index: 5, kind: output, shape index: {}]
  %s6 = sld [smem:[#allocation0]]
  $region46: #{tpu_custom_call.1} parent=0
    _
  %s8 = ssub.s32 1, %s6
  %s9 = scalar_select 0, %s8, %s6
  $region1: #{tpu_custom_call.1} parent=0
    #allocation2 [shape = 'u8[8192]{0}', space=vmem, size = 0x2000, scoped, tag = 'input window, operand 0, single buffered']
    #allocation3 [shape = 's32[1]{0}', space=sflag, size = 0x4, scoped, tag = 'scoped memory for tpu_custom_call.1']
    #allocation4 [shape = 's32[1]{0}', space=sflag, size = 0x4, scoped, tag = 'scoped memory for tpu_custom_call.1']
    #allocation5 [shape = 'u8[4096]{0}', space=vmem, size = 0x1000, scoped, tag = 'input window, operand 1, single buffered']
    #allocation6 [shape = 's32[1]{0}', space=sflag, size = 0x4, scoped, tag = 'scoped memory for tpu_custom_call.1']
    #allocation7 [shape = 'u8[131072]{0}', space=vmem, size = 0x20000, scoped, tag = 'input window, operand 2, single buffered']
    #allocation8 [shape = 'u8[65536]{0}', space=vmem, size = 0x10000, scoped, tag = 'input window, operand 4, single buffered']
    #allocation9 [shape = 's32[1]{0}', space=sflag, size = 0x4, scoped, tag = 'scoped memory for tpu_custom_call.1']
    #allocation10 [shape = 'u8[4096]{0}', space=vmem, size = 0x1000, scoped, tag = 'output window, operand 0, single buffered']
    %10 = vsyncpa [#allocation3], 0
    %11 = vsyncpa [#allocation6], 0
    %12 = vsyncpa [#allocation9], 0
    %13 = vsyncpa [#allocation4], 0
    // Predicated region
    $region2: #{tpu_custom_call.1} parent=1 // pred_check
      _
    $region3: #{tpu_custom_call.1} parent=1 // pred_check_branch
      %15 = sbr.rel (0) target = $region5
    $region4: #{tpu_custom_call.1} parent=1 // pred_region
      %s17 = ssub.s32 256, 256
      %18 = vsyncadd [#allocation3], %s17
      %s20 = sshll.u32 [#allocation2], 4
      %s21 = int_to_ptr.vmem [resolvable:$true] %s20
      %23 = dma.hbm_to_vmem [thread:$0]  %s0, 256, %s21, [#allocation3]
    $region5: #{tpu_custom_call.1} parent=1 // pred_fallthru
      _
    // Predicated region
    $region6: #{tpu_custom_call.1} parent=1 // pred_check
      _
    $region7: #{tpu_custom_call.1} parent=1 // pred_check_branch
      %25 = sbr.rel (0) target = $region9
    $region8: #{tpu_custom_call.1} parent=1 // pred_region
      %s27 = ssub.s32 128, 128
      %28 = vsyncadd [#allocation6], %s27
      %s30 = sshll.u32 [#allocation5], 4
      %s31 = int_to_ptr.vmem [resolvable:$true] %s30
      %33 = dma.hbm_to_vmem [thread:$0]  %s1, 128, %s31, [#allocation6]
    $region9: #{tpu_custom_call.1} parent=1 // pred_fallthru
      _
    // Predicated region
    $region10: #{tpu_custom_call.1} parent=1 // pred_check
      _
    $region11: #{tpu_custom_call.1} parent=1 // pred_check_branch
      %35 = sbr.rel (0) target = $region13
    $region12: #{tpu_custom_call.1} parent=1 // pred_region
      %s37 = ssub.s32 4096, 4096
      %38 = vsyncadd [#allocation6], %s37
      %s39 = sshll.u32 [#allocation7], 4
      %s40 = int_to_ptr.vmem [resolvable:$true] %s39
      %45 = dma.hbm_to_vmem [thread:$0]  %s2, 4096, %s40, [#allocation6], 128, 128, 8
    $region13: #{tpu_custom_call.1} parent=1 // pred_fallthru
      _
    // Predicated region
    $region14: #{tpu_custom_call.1} parent=1 // pred_check
      _
    $region15: #{tpu_custom_call.1} parent=1 // pred_check_branch
      %47 = sbr.rel (0) target = $region17
    $region16: #{tpu_custom_call.1} parent=1 // pred_region
      _
    $region17: #{tpu_custom_call.1} parent=1 // pred_fallthru
      _
    // Predicated region
    $region18: #{tpu_custom_call.1} parent=1 // pred_check
      _
    $region19: #{tpu_custom_call.1} parent=1 // pred_check_branch
      %49 = sbr.rel (0) target = $region21
    $region20: #{tpu_custom_call.1} parent=1 // pred_region
      %s51 = ssub.s32 2048, 2048
      %52 = vsyncadd [#allocation9], %s51
      %s53 = sshll.u32 [#allocation8], 4
      %s54 = int_to_ptr.vmem [resolvable:$true] %s53
      %59 = dma.hbm_to_vmem [thread:$0]  %s4, 2048, %s54, [#allocation9], 128, 128, 8
    $region21: #{tpu_custom_call.1} parent=1 // pred_fallthru
      _
    // Predicated region
    $region22: #{tpu_custom_call.1} parent=1 // pred_check
      _
    $region23: #{tpu_custom_call.1} parent=1 // pred_check_branch
      %61 = sbr.rel (0) target = $region25
    $region24: #{tpu_custom_call.1} parent=1 // pred_region
      %62 = dma.done [#allocation3], 256
    $region25: #{tpu_custom_call.1} parent=1 // pred_fallthru
      _
    // Predicated region
    $region26: #{tpu_custom_call.1} parent=1 // pred_check
      _
    $region27: #{tpu_custom_call.1} parent=1 // pred_check_branch
      %64 = sbr.rel (0) target = $region29
    $region28: #{tpu_custom_call.1} parent=1 // pred_region
      %65 = dma.done [#allocation6], 128
    $region29: #{tpu_custom_call.1} parent=1 // pred_fallthru
      _
    // Predicated region
    $region30: #{tpu_custom_call.1} parent=1 // pred_check
      _
    $region31: #{tpu_custom_call.1} parent=1 // pred_check_branch
      %67 = sbr.rel (0) target = $region33
    $region32: #{tpu_custom_call.1} parent=1 // pred_region
      %68 = dma.done [#allocation6], 4096
    $region33: #{tpu_custom_call.1} parent=1 // pred_fallthru
      _
    // Predicated region
    $region34: #{tpu_custom_call.1} parent=1 // pred_check
      _
    $region35: #{tpu_custom_call.1} parent=1 // pred_check_branch
      %70 = sbr.rel (0) target = $region37
    $region36: #{tpu_custom_call.1} parent=1 // pred_region
      %71 = dma.done [#allocation9], 2048
    $region37: #{tpu_custom_call.1} parent=1 // pred_fallthru
      _
    %v72 = vld [vmem:[#allocation2] sm:$0xff]
    %v73 = vld [vmem:[#allocation2 + $0x8] sm:$0xff]
    %v74 = vld [vmem:[#allocation7] sm:$0xff]
    %v75 = vld [vmem:[#allocation7 + $0x8] sm:$0xff]
    %v76 = vld [vmem:[#allocation7 + $0x10] sm:$0xff]
    %v77 = vld [vmem:[#allocation7 + $0x18] sm:$0xff]
    %v78 = vld [vmem:[#allocation7 + $0x20] sm:$0xff]
    %v79 = vld [vmem:[#allocation7 + $0x28] sm:$0xff]
    %v80 = vld [vmem:[#allocation7 + $0x30] sm:$0xff]
    %v81 = vld [vmem:[#allocation7 + $0x38] sm:$0xff]
    %v82 = vld [vmem:[#allocation7 + $0x40] sm:$0xff]
    %v83 = vld [vmem:[#allocation7 + $0x48] sm:$0xff]
    %v84 = vld [vmem:[#allocation7 + $0x50] sm:$0xff]
    %v85 = vld [vmem:[#allocation7 + $0x58] sm:$0xff]
    %v86 = vld [vmem:[#allocation7 + $0x60] sm:$0xff]
    %v87 = vld [vmem:[#allocation7 + $0x68] sm:$0xff]
    %v88 = vld [vmem:[#allocation7 + $0x70] sm:$0xff]
    %v89 = vld [vmem:[#allocation7 + $0x78] sm:$0xff]
    %v90 = vld [vmem:[#allocation7 + $0x80] sm:$0xff]
    %v91 = vld [vmem:[#allocation7 + $0x88] sm:$0xff]
    %v92 = vld [vmem:[#allocation7 + $0x90] sm:$0xff]
    %v93 = vld [vmem:[#allocation7 + $0x98] sm:$0xff]
    %v94 = vld [vmem:[#allocation7 + $0xa0] sm:$0xff]
    %v95 = vld [vmem:[#allocation7 + $0xa8] sm:$0xff]
    %v96 = vld [vmem:[#allocation7 + $0xb0] sm:$0xff]
    %v97 = vld [vmem:[#allocation7 + $0xb8] sm:$0xff]
    %v98 = vld [vmem:[#allocation7 + $0xc0] sm:$0xff]
    %v99 = vld [vmem:[#allocation7 + $0xc8] sm:$0xff]
    %v100 = vld [vmem:[#allocation7 + $0xd0] sm:$0xff]
    %v101 = vld [vmem:[#allocation7 + $0xd8] sm:$0xff]
    %v102 = vld [vmem:[#allocation7 + $0xe0] sm:$0xff]
    %v103 = vld [vmem:[#allocation7 + $0xe8] sm:$0xff]
    %v104 = vld [vmem:[#allocation7 + $0xf0] sm:$0xff]
    %v105 = vld [vmem:[#allocation7 + $0xf8] sm:$0xff]
    %v106 = vld [vmem:[%s3] sm:$0x1]
    %v108 = vlaneseq
    %v109 = vshrl.u32 %v108, 7
    %v110 = vsub.s32 0, %v109
    %v111 = vrot.slane %v106, %v110
    %113 = vmatprep.subr.mxu0 0.0
    %114 = vmatpush1.msra.mxu0 %v89
    %115 = vmatprep.subr.mxu0 0.0
    %116 = vmatpush1.msra.mxu0 %v88
    %117 = vmatprep.subr.mxu0 0.0
    %118 = vmatpush1.msra.mxu0 %v87
    %119 = vmatprep.subr.mxu0 0.0
    %120 = vmatpush1.msra.mxu0 %v86
    %121 = vmatprep.subr.mxu0 0.0
    %122 = vmatpush1.msra.mxu0 %v85
    %123 = vmatprep.subr.mxu0 0.0
    %124 = vmatpush1.msra.mxu0 %v84
    %125 = vmatprep.subr.mxu0 0.0
    %126 = vmatpush1.msra.mxu0 %v83
    %127 = vmatprep.subr.mxu0 0.0
    %128 = vmatpush1.msra.mxu0 %v82
    %129 = vmatprep.subr.mxu0 0.0
    %130 = vmatpush1.msra.mxu0 %v81
    %131 = vmatprep.subr.mxu0 0.0
    %132 = vmatpush1.msra.mxu0 %v80
    %133 = vmatprep.subr.mxu0 0.0
    %134 = vmatpush1.msra.mxu0 %v79
    %135 = vmatprep.subr.mxu0 0.0
    %136 = vmatpush1.msra.mxu0 %v78
    %137 = vmatprep.subr.mxu0 0.0
    %138 = vmatpush1.msra.mxu0 %v77
    %139 = vmatprep.subr.mxu0 0.0
    %140 = vmatpush1.msra.mxu0 %v76
    %141 = vmatprep.subr.mxu0 0.0
    %142 = vmatpush1.msra.mxu0 %v75
    %143 = vmatprep.subr.mxu0 0.0
    %144 = vmatpush1.msra.mxu0 %v74
    %145 = vmatprep.subr.mxu0 0.0
    %146 = vmatpush2.msra.mxu0 %v105
    %147 = vmatprep.subr.mxu0 0.0
    %148 = vmatpush2.msra.mxu0 %v104
    %149 = vmatprep.subr.mxu0 0.0
    %150 = vmatpush2.msra.mxu0 %v103
    %151 = vmatprep.subr.mxu0 0.0
    %152 = vmatpush2.msra.mxu0 %v102
    %153 = vmatprep.subr.mxu0 0.0
    %154 = vmatpush2.msra.mxu0 %v101
    %155 = vmatprep.subr.mxu0 0.0
    %156 = vmatpush2.msra.mxu0 %v100
    %157 = vmatprep.subr.mxu0 0.0
    %158 = vmatpush2.msra.mxu0 %v99
    %159 = vmatprep.subr.mxu0 0.0
    %160 = vmatpush2.msra.mxu0 %v98
    %161 = vmatprep.subr.mxu0 0.0
    %162 = vmatpush2.msra.mxu0 %v97
    %163 = vmatprep.subr.mxu0 0.0
    %164 = vmatpush2.msra.mxu0 %v96
    %165 = vmatprep.subr.mxu0 0.0
    %166 = vmatpush2.msra.mxu0 %v95
    %167 = vmatprep.subr.mxu0 0.0
    %168 = vmatpush2.msra.mxu0 %v94
    %169 = vmatprep.subr.mxu0 0.0
    %170 = vmatpush2.msra.mxu0 %v93
    %171 = vmatprep.subr.mxu0 0.0
    %172 = vmatpush2.msra.mxu0 %v92
    %173 = vmatprep.subr.mxu0 0.0
    %174 = vmatpush2.msra.mxu0 %v91
    %175 = vmatprep.subr.mxu0 0.0
    %176 = vmatpush2.msra.mxu0 %v90
    %177 = vmatprep.mubr.f32.mxu0 %v73
    %178 = vmatmul.mubr.f32.gmra.mxu0 %v72
    %v179 = vpop.f32.mrf.mxu0
    %v180 = vadd.f32 %v111, %v179
    %v181 = vpop.f32.mrf.mxu0
    %182 = vdwg.mxu0
    %v183 = vxor.u32 %v180, 2147483648
    %v184 = vmul.f32 %v183, 1.442695
    %v185 = vpow.pop %v184
    %v186 = vadd.f32 %v185, 1.0
    %v187 = vrcp.pop %v186
    %v188 = vmul.f32 1.0, %v187
    %v189 = vmul.f32 %v180, %v188
    %v190 = vld [vmem:[#allocation8] sm:$0xff]
    %v191 = vld [vmem:[#allocation8 + $0x8] sm:$0xff]
    %v192 = vld [vmem:[#allocation8 + $0x10] sm:$0xff]
    %v193 = vld [vmem:[#allocation8 + $0x18] sm:$0xff]
    %v194 = vld [vmem:[#allocation8 + $0x20] sm:$0xff]
    %v195 = vld [vmem:[#allocation8 + $0x28] sm:$0xff]
    %v196 = vld [vmem:[#allocation8 + $0x30] sm:$0xff]
    %v197 = vld [vmem:[#allocation8 + $0x38] sm:$0xff]
    %v198 = vld [vmem:[#allocation8 + $0x40] sm:$0xff]
    %v199 = vld [vmem:[#allocation8 + $0x48] sm:$0xff]
    %v200 = vld [vmem:[#allocation8 + $0x50] sm:$0xff]
    %v201 = vld [vmem:[#allocation8 + $0x58] sm:$0xff]
    %v202 = vld [vmem:[#allocation8 + $0x60] sm:$0xff]
    %v203 = vld [vmem:[#allocation8 + $0x68] sm:$0xff]
    %v204 = vld [vmem:[#allocation8 + $0x70] sm:$0xff]
    %v205 = vld [vmem:[#allocation8 + $0x78] sm:$0xff]
    %v206 = vld [vmem:[#allocation5] sm:$0xff]
    %207 = vmatprep.subr.mxu0 0.0
    %208 = vmatpush1.msra.mxu0 %v205
    %209 = vmatprep.subr.mxu0 0.0
    %210 = vmatpush1.msra.mxu0 %v204
    %211 = vmatprep.subr.mxu0 0.0
    %212 = vmatpush1.msra.mxu0 %v203
    %213 = vmatprep.subr.mxu0 0.0
    %214 = vmatpush1.msra.mxu0 %v202
    %215 = vmatprep.subr.mxu0 0.0
    %216 = vmatpush1.msra.mxu0 %v201
    %217 = vmatprep.subr.mxu0 0.0
    %218 = vmatpush1.msra.mxu0 %v200
    %219 = vmatprep.subr.mxu0 0.0
    %220 = vmatpush1.msra.mxu0 %v199
    %221 = vmatprep.subr.mxu0 0.0
    %222 = vmatpush1.msra.mxu0 %v198
    %223 = vmatprep.subr.mxu0 0.0
    %224 = vmatpush1.msra.mxu0 %v197
    %225 = vmatprep.subr.mxu0 0.0
    %226 = vmatpush1.msra.mxu0 %v196
    %227 = vmatprep.subr.mxu0 0.0
    %228 = vmatpush1.msra.mxu0 %v195
    %229 = vmatprep.subr.mxu0 0.0
    %230 = vmatpush1.msra.mxu0 %v194
    %231 = vmatprep.subr.mxu0 0.0
    %232 = vmatpush1.msra.mxu0 %v193
    %233 = vmatprep.subr.mxu0 0.0
    %234 = vmatpush1.msra.mxu0 %v192
    %235 = vmatprep.subr.mxu0 0.0
    %236 = vmatpush1.msra.mxu0 %v191
    %237 = vmatprep.subr.mxu0 0.0
    %238 = vmatpush1.msra.mxu0 %v190
    %239 = vmatprep.subr.mxu0 0.0
    %240 = vmatpush2.msra.mxu0 0.0
    %241 = vmatprep.subr.mxu0 0.0
    %242 = vmatpush2.msra.mxu0 0.0
    %243 = vmatprep.subr.mxu0 0.0
    %244 = vmatpush2.msra.mxu0 0.0
    %245 = vmatprep.subr.mxu0 0.0
    %246 = vmatpush2.msra.mxu0 0.0
    %247 = vmatprep.subr.mxu0 0.0
    %248 = vmatpush2.msra.mxu0 0.0
    %249 = vmatprep.subr.mxu0 0.0
    %250 = vmatpush2.msra.mxu0 0.0
    %251 = vmatprep.subr.mxu0 0.0
    %252 = vmatpush2.msra.mxu0 0.0
    %253 = vmatprep.subr.mxu0 0.0
    %254 = vmatpush2.msra.mxu0 0.0
    %255 = vmatprep.subr.mxu0 0.0
    %256 = vmatpush2.msra.mxu0 0.0
    %257 = vmatprep.subr.mxu0 0.0
    %258 = vmatpush2.msra.mxu0 0.0
    %259 = vmatprep.subr.mxu0 0.0
    %260 = vmatpush2.msra.mxu0 0.0
    %261 = vmatprep.subr.mxu0 0.0
    %262 = vmatpush2.msra.mxu0 0.0
    %263 = vmatprep.subr.mxu0 0.0
    %264 = vmatpush2.msra.mxu0 0.0
    %265 = vmatprep.subr.mxu0 0.0
    %266 = vmatpush2.msra.mxu0 0.0
    %267 = vmatprep.subr.mxu0 0.0
    %268 = vmatpush2.msra.mxu0 0.0
    %269 = vmatprep.subr.mxu0 0.0
    %270 = vmatpush2.msra.mxu0 0.0
    %271 = vmatprep.mubr.f32.mxu0 0.0
    %272 = vmatmul.mubr.f32.gmra.mxu0 %v189
    %v273 = vpop.f32.mrf.mxu0
    %v274 = vadd.f32 %v206, %v273
    %v275 = vpop.f32.mrf.mxu0
    %276 = vdwg.mxu0
    %277 = vst [vmem:[#allocation10] sm:$0xff] %v274
    // Predicated region
    $region38: #{tpu_custom_call.1} parent=1 // pred_check
      _
    $region39: #{tpu_custom_call.1} parent=1 // pred_check_branch
      %279 = sbr.rel (0) target = $region41
    $region40: #{tpu_custom_call.1} parent=1 // pred_region
      %s281 = ssub.s32 128, 128
      %282 = vsyncadd [#allocation4], %s281
      %s284 = sshll.u32 [#allocation10], 4
      %s285 = int_to_ptr.vmem [resolvable:$true] %s284
      %287 = dma.vmem_to_hbm [thread:$0]  %s285, 128, %s5, [#allocation4]
    $region41: #{tpu_custom_call.1} parent=1 // pred_fallthru
      _
    // Predicated region
    $region42: #{tpu_custom_call.1} parent=1 // pred_check
      _
    $region43: #{tpu_custom_call.1} parent=1 // pred_check_branch
      %289 = sbr.rel (0) target = $region45
    $region44: #{tpu_custom_call.1} parent=1 // pred_region
      %290 = dma.done [#allocation4], 128
    $region45: #{tpu_custom_call.1} parent=1 // pred_fallthru
      _
    %291 = vsyncpa [#allocation3], 1
    %292 = vsyncpa [#allocation6], 1
    %293 = vsyncpa [#allocation9], 1
    %294 = vsyncpa [#allocation4], 1

</llo_original>
